<compile_context>
chip_gen: v7x
topology: tpu7x:2x2x1
jax: 0.10.0
libtpu: 0.0.40
codegen_flags: <defaults>
</compile_context>

<pallas_src>
import functools
import math

import jax
import jax.numpy as jnp
from jax import lax
from jax.experimental import pallas as pl
from jax.experimental.pallas import tpu as pltpu


def _self_attention_kernel(x_ref, w_qkv_ref, o_ref, *, d_pad):
    # x_ref: (seq, d_in) f32 (batch dim squeezed by BlockSpec)
    # w_qkv_ref: (d_in, 3*d_pad) bf16, softmax scale already folded into Q columns
    x = x_ref[...].astype(jnp.bfloat16)   # bf16 MXU operand, f32 accumulation below
    w = w_qkv_ref[...]

    # Fused QKV projection: one MXU matmul instead of three.
    qkv = jnp.dot(x, w, preferred_element_type=jnp.float32)   # (seq, 3*d_pad) f32
    q = qkv[:, 0 * d_pad:1 * d_pad]
    k = qkv[:, 1 * d_pad:2 * d_pad]
    v = qkv[:, 2 * d_pad:3 * d_pad]

    # attn_scores = Q @ K^T (scale folded into W_query). Contract last dims of
    # q and k directly — no explicit transpose through the XLU. bf16 operands,
    # f32 accumulation.
    scores = lax.dot_general(
        q.astype(jnp.bfloat16), k.astype(jnp.bfloat16),
        (((1,), (1,)), ((), ())),
        preferred_element_type=jnp.float32,
    )  # (seq, seq) f32

    # Numerically stable softmax along the last dim, kept in f32.
    m = jnp.max(scores, axis=-1, keepdims=True)
    e = jnp.exp(scores - m)
    denom = jnp.sum(e, axis=-1, keepdims=True)
    attn_weights = e * pl.reciprocal(denom, approx=True)   # EUP vrcp (free slot)

    # context = attn_weights @ V  (bf16 MXU operands; padded V columns are zero).
    ctx = jnp.dot(
        attn_weights.astype(jnp.bfloat16), v.astype(jnp.bfloat16),
        preferred_element_type=jnp.float32,
    )
    o_ref[...] = ctx.astype(o_ref.dtype)


def make_self_attention_v2(w_query, w_key, w_value):
    """Build a jitted apply fn. w_*: (d_in, d_out) == PyTorch Linear weight.T.

    Weight fusion/padding/casting happens ONCE here (not per call).
    Returned fn accepts x of shape (seq, d_in) or (batch, seq, d_in).
    """
    d_in, d_out = w_query.shape
    scale = 1.0 / math.sqrt(d_out)
    # Pad d_out up to a multiple of 128 so every operand / output store is
    # lane-dense (unmasked vst); padding columns contribute exactly 0.
    d_pad = ((d_out + 127) // 128) * 128

    def pad_cols(w):
        return jnp.pad(w, ((0, 0), (0, d_pad - d_out)))

    # Fold 1/sqrt(d_out) into the query weight and fuse the three projections
    # into one RHS; cast to bf16 once for the fast MXU path.
    w_qkv = jnp.concatenate(
        [pad_cols(w_query * scale), pad_cols(w_key), pad_cols(w_value)], axis=1
    ).astype(jnp.bfloat16)                       # (d_in, 3*d_pad)
    w_qkv = jax.block_until_ready(jax.device_put(w_qkv))   # materialized once

    kernel = functools.partial(_self_attention_kernel, d_pad=d_pad)

    @jax.jit
    def apply(x):
        squeeze = (x.ndim == 2)
        xb = x[None] if squeeze else x           # (B, seq, d_in)
        batch, seq, _ = xb.shape

        out_padded = pl.pallas_call(
            kernel,
            out_shape=jax.ShapeDtypeStruct((batch, seq, d_pad), x.dtype),
            grid=(batch,),
            in_specs=[
                # One (seq, d_in) problem per grid step; batch dim squeezed.
                pl.BlockSpec((None, seq, d_in), lambda b: (b, 0, 0)),
                # Fused weight: same block every step -> stays VMEM-resident.
                pl.BlockSpec((d_in, 3 * d_pad), lambda b: (0, 0)),
            ],
            out_specs=pl.BlockSpec((None, seq, d_pad), lambda b: (b, 0, 0)),
            compiler_params=pltpu.CompilerParams(
                dimension_semantics=("parallel",),   # shards across v7x's 2 TCs
            ),
        )(xb, w_qkv)

        out = out_padded[..., :d_out]            # fuses under this jit
        return out[0] if squeeze else out

    return apply


def _reference(x, wq, wk, wv):
    q = x @ wq
    k = x @ wk
    v = x @ wv
    scores = q @ k.T / math.sqrt(k.shape[-1])
    w = jax.nn.softmax(scores, axis=-1)
    return w @ v


if __name__ == "__main__":
    # Small shapes implied by the module: x is (seq, d_in), output is (seq, d_out).
    seq, d_in, d_out = 8, 32, 16
    batch = 4

    key = jax.random.PRNGKey(0)
    kx, kxb, kq, kk, kv = jax.random.split(key, 5)

    # Deterministic parameter init (mimics nn.Linear's uniform(-1/sqrt(d_in), 1/sqrt(d_in))).
    bound = 1.0 / math.sqrt(d_in)
    # Stored as (d_in, d_out) == PyTorch weight.T so the kernel does x @ W.
    w_query = jax.random.uniform(kq, (d_in, d_out), jnp.float32, -bound, bound)
    w_key = jax.random.uniform(kk, (d_in, d_out), jnp.float32, -bound, bound)
    w_value = jax.random.uniform(kv, (d_in, d_out), jnp.float32, -bound, bound)

    attn = make_self_attention_v2(w_query, w_key, w_value)

    # --- Unbatched call: matches the PyTorch module's forward(x) exactly. ---
    x = jax.random.normal(kx, (seq, d_in), dtype=jnp.float32)
    out = jax.block_until_ready(attn(x))
    ref = _reference(x, w_query, w_key, w_value)
    assert out.shape == (seq, d_out)
    # Tolerance covers bf16 MXU operands + EUP approx reciprocal in the softmax.
    assert jnp.allclose(out, ref, atol=2e-2, rtol=2e-2), "unbatched mismatch vs reference"

    # --- Batched call: grid 'parallel' axis over batch amortizes launch overhead. ---
    xb = jax.random.normal(kxb, (batch, seq, d_in), dtype=jnp.float32)
    outb = jax.block_until_ready(attn(xb))
    refb = jax.vmap(lambda xi: _reference(xi, w_query, w_key, w_value))(xb)
    assert outb.shape == (batch, seq, d_out)
    assert jnp.allclose(outb, refb, atol=2e-2, rtol=2e-2), "batched mismatch vs reference"

    print("KERNEL_OK")
</pallas_src>

<mosaic_0001>
module attributes {stable_mosaic.version = 11 : i64} {
  func.func @_self_attention_kernel(%arg0: i32, %arg1: memref<1x8x32xf32, #tpu.memory_space<vmem>>, %arg2: memref<32x384xbf16, #tpu.memory_space<vmem>>, %arg3: memref<1x8x128xf32, #tpu.memory_space<vmem>>) attributes {dimension_semantics = [#tpu.dimension_semantics<parallel>], iteration_bounds = array<i64: 1>, scalar_prefetch = 0 : i64, scratch_operands = 0 : i64, tpu.core_type = #tpu.core_type<tc>, window_params = [{transform_indices = @transform_0, window_bounds = array<i64: 1, 8, 32>}, {pipeline_mode = #tpu.pipeline_mode<synchronous>, transform_indices = @transform_1, window_bounds = array<i64: 32, 384>}, {transform_indices = @transform_2, window_bounds = array<i64: 1, 8, 128>}]} {
    %c0 = arith.constant 0 : index
    %c0_0 = arith.constant 0 : index
    %c0_1 = arith.constant 0 : index
    %0 = vector.load %arg1[%c0, %c0_0, %c0_1] : memref<1x8x32xf32, #tpu.memory_space<vmem>>, vector<1x8x32xf32>
    %1 = vector.shape_cast %0 : vector<1x8x32xf32> to vector<8x32xf32>
    %2 = arith.truncf %1 : vector<8x32xf32> to vector<8x32xbf16>
    %c0_2 = arith.constant 0 : index
    %c0_3 = arith.constant 0 : index
    %3 = vector.load %arg2[%c0_2, %c0_3] : memref<32x384xbf16, #tpu.memory_space<vmem>>, vector<32x384xbf16>
    %cst = arith.constant dense<0.000000e+00> : vector<8x384xf32>
    %4 = tpu.matmul %2, %3, %cst {dimension_numbers = #tpu.dot_dimension_numbers<[1], [0], [0], [1], [0, 0, 1, 1], [], []>} : vector<8x32xbf16>, vector<32x384xbf16>, vector<8x384xf32> -> vector<8x384xf32>
    %5 = vector.extract_strided_slice %4 {offsets = [0, 0], sizes = [8, 128], strides = [1, 1]} : vector<8x384xf32> to vector<8x128xf32>
    %6 = vector.extract_strided_slice %4 {offsets = [0, 128], sizes = [8, 128], strides = [1, 1]} : vector<8x384xf32> to vector<8x128xf32>
    %7 = vector.extract_strided_slice %4 {offsets = [0, 256], sizes = [8, 128], strides = [1, 1]} : vector<8x384xf32> to vector<8x128xf32>
    %8 = arith.truncf %5 : vector<8x128xf32> to vector<8x128xbf16>
    %9 = arith.truncf %6 : vector<8x128xf32> to vector<8x128xbf16>
    %cst_4 = arith.constant dense<0.000000e+00> : vector<8x8xf32>
    %10 = tpu.matmul %8, %9, %cst_4 {dimension_numbers = #tpu.dot_dimension_numbers<[1], [1], [0], [0], [0, 0, 1, 0], [], []>} : vector<8x128xbf16>, vector<8x128xbf16>, vector<8x8xf32> -> vector<8x8xf32>
    %cst_5 = arith.constant dense<0xFF800000> : vector<8xf32>
    %11 = vector.multi_reduction <maximumf>, %10, %cst_5 [1] : vector<8x8xf32> to vector<8xf32>
    %12 = vector.shape_cast %11 : vector<8xf32> to vector<8x1xf32>
    %13 = vector.broadcast %12 : vector<8x1xf32> to vector<8x8xf32>
    %14 = arith.subf %10, %13 : vector<8x8xf32>
    %15 = math.exp %14 : vector<8x8xf32>
    %cst_6 = arith.constant dense<0.000000e+00> : vector<8xf32>
    %16 = vector.multi_reduction <add>, %15, %cst_6 [1] : vector<8x8xf32> to vector<8xf32>
    %17 = vector.shape_cast %16 : vector<8xf32> to vector<8x1xf32>
    %18 = tpu.reciprocal %17 {approx = true} : vector<8x1xf32> -> vector<8x1xf32>
    %19 = vector.broadcast %18 : vector<8x1xf32> to vector<8x8xf32>
    %20 = arith.mulf %15, %19 : vector<8x8xf32>
    %21 = arith.truncf %20 : vector<8x8xf32> to vector<8x8xbf16>
    %22 = arith.truncf %7 : vector<8x128xf32> to vector<8x128xbf16>
    %cst_7 = arith.constant dense<0.000000e+00> : vector<8x128xf32>
    %23 = tpu.matmul %21, %22, %cst_7 {dimension_numbers = #tpu.dot_dimension_numbers<[1], [0], [0], [1], [0, 0, 1, 1], [], []>} : vector<8x8xbf16>, vector<8x128xbf16>, vector<8x128xf32> -> vector<8x128xf32>
    %c0_8 = arith.constant 0 : index
    %c0_9 = arith.constant 0 : index
    %c0_10 = arith.constant 0 : index
    %24 = vector.load %arg3[%c0_8, %c0_9, %c0_10] : memref<1x8x128xf32, #tpu.memory_space<vmem>>, vector<1x8x128xf32>
    %25 = vector.shape_cast %24 : vector<1x8x128xf32> to vector<8x128xf32>
    %26 = vector.shape_cast %23 : vector<8x128xf32> to vector<1x8x128xf32>
    tpu.vector_store %arg3[%c0_8, %c0_9, %c0_10], %26 {strides = array<i32>} : memref<1x8x128xf32, #tpu.memory_space<vmem>>, vector<1x8x128xf32>,
    return
  }
  func.func @transform_0(%arg0: i32) -> (i32, i32, i32) {
    %c0_i32 = arith.constant 0 : i32
    %c0_i32_0 = arith.constant 0 : i32
    %c0_i32_1 = arith.constant 0 : i32
    return %arg0, %c0_i32, %c0_i32_0 : i32, i32, i32
  }
  func.func @transform_1(%arg0: i32) -> (i32, i32) {
    %c0_i32 = arith.constant 0 : i32
    %c0_i32_0 = arith.constant 0 : i32
    %c0_i32_1 = arith.constant 0 : i32
    return %c0_i32, %c0_i32_0 : i32, i32
  }
  func.func @transform_2(%arg0: i32) -> (i32, i32, i32) {
    %c0_i32 = arith.constant 0 : i32
    %c0_i32_0 = arith.constant 0 : i32
    %c0_i32_1 = arith.constant 0 : i32
    return %arg0, %c0_i32, %c0_i32_0 : i32, i32, i32
  }
}

</mosaic_0001>

<llo_original>
// kernel: apply.1
$region0: #{apply.1}
  #allocation0 [shape = 'u32[]', space=smem, size = 0x4, offset = 0x4, fixed_abs, tag = 'smem constant byte address 0x4 - core index']
  #allocation1 [shape = 'u32[144,128]{1,0:T(1,128)}', space=vmem, size = 0x12000, scoped, tag = 'internal scratch']
  %s0 = inlined_call_operand.vmem [shape: f32[1,8,32], index: 0, kind: input, shape index: {}]
  %s1 = inlined_call_operand.vmem [shape: bf16[32,384], index: 1, kind: input, shape index: {}]
  %s2 = inlined_call_operand.vmem [shape: f32[1,8,128], index: 2, kind: output, shape index: {}]
  %s3 = sld [smem:[#allocation0]]
  $region18: #{apply.1} parent=0
    _
  %s5 = ssub.s32 1, %s3
  %s6 = scalar_select 0, %s5, %s3
  // Predicated region
  $region2: #{apply.1} parent=0 // pred_check
    _
  $region3: #{apply.1} parent=0 // pred_check_branch
    %8 = sbr.rel (0) target = $region5
  $region4: #{apply.1} parent=0 // pred_region
    _
  $region5: #{apply.1} parent=0 // pred_fallthru
    _
  // Predicated region
  $region6: #{apply.1} parent=0 // pred_check
    _
  $region7: #{apply.1} parent=0 // pred_check_branch
    %10 = sbr.rel (0) target = $region9
  $region8: #{apply.1} parent=0 // pred_region
    _
  $region9: #{apply.1} parent=0 // pred_fallthru
    _
  %v12 = vld [vmem:[%s0] sm:$0xff]
  %v13 = vpack.c.bf16 %v12, %v12
  %v14 = vld [vmem:[%s1] sm:$0xff]
  %v15 = vld [vmem:[%s1 + $0x8] sm:$0xf]
  %v16 = vld [vmem:[%s1 + $0xc] sm:$0xff]
  %v17 = vld [vmem:[%s1 + $0x14] sm:$0xf]
  %v18 = vld [vmem:[%s1 + $0x18] sm:$0xff]
  %v19 = vld [vmem:[%s1 + $0x20] sm:$0xf]
  %v20 = vld [vmem:[%s1 + $0x24] sm:$0xff]
  %v21 = vld [vmem:[%s1 + $0x2c] sm:$0xf]
  %v30 = vunpack.c.l.b16 %v14
  %v31 = vunpack.c.h.b16 %v14
  %v32 = vunpack.c.l.b16 %v15
  %v33 = vunpack.c.l.b16 %v16
  %v34 = vunpack.c.h.b16 %v16
  %v35 = vunpack.c.l.b16 %v17
  %v36 = vunpack.c.l.b16 %v18
  %v37 = vunpack.c.h.b16 %v18
  %v38 = vunpack.c.l.b16 %v19
  %v39 = vunpack.c.l.b16 %v20
  %v40 = vunpack.c.h.b16 %v20
  %v41 = vunpack.c.l.b16 %v21
  %v42 = vpack.c.b16 %v33, %v30
  %v43 = vpack.c.b16 %v34, %v31
  %v44 = vpack.c.b16 %v35, %v32
  %v45 = vpack.c.b16 %v39, %v36
  %v46 = vpack.c.b16 %v40, %v37
  %v47 = vpack.c.b16 %v41, %v38
  %vm54 = vcmask 261120
  %v56 = vsel %vm54, %v13, 0
  %58 = vmatprep.subr.bf16.mxu0 %v43
  %59 = vmatpush1.bf16.msra.mxu0 %v42
  %60 = vmatprep.subr.bf16.mxu0 %v46
  %61 = vmatpush1.bf16.msra.mxu0 %v45
  %62 = vmatprep.subr.bf16.mxu0 0
  %63 = vmatpush1.bf16.msra.mxu0 0
  %64 = vmatprep.subr.bf16.mxu0 0
  %65 = vmatpush1.bf16.msra.mxu0 0
  %66 = vmatprep.subr.bf16.mxu0 0
  %67 = vmatpush1.bf16.msra.mxu0 0
  %68 = vmatprep.subr.bf16.mxu0 0
  %69 = vmatpush1.bf16.msra.mxu0 0
  %70 = vmatprep.subr.bf16.mxu0 0
  %71 = vmatpush1.bf16.msra.mxu0 0
  %72 = vmatprep.subr.bf16.mxu0 0
  %73 = vmatpush1.bf16.msra.mxu0 0
  %74 = vmatprep.subr.bf16.mxu0 0
  %75 = vmatpush1.bf16.msra.mxu0 0
  %76 = vmatprep.subr.bf16.mxu0 0
  %77 = vmatpush1.bf16.msra.mxu0 0
  %78 = vmatprep.subr.bf16.mxu0 0
  %79 = vmatpush1.bf16.msra.mxu0 0
  %80 = vmatprep.subr.bf16.mxu0 0
  %81 = vmatpush1.bf16.msra.mxu0 0
  %82 = vmatprep.subr.bf16.mxu0 0
  %83 = vmatpush1.bf16.msra.mxu0 0
  %84 = vmatprep.subr.bf16.mxu0 0
  %85 = vmatpush1.bf16.msra.mxu0 0
  %86 = vmatprep.subr.bf16.mxu0 0
  %87 = vmatpush1.bf16.msra.mxu0 0
  %88 = vmatprep.subr.bf16.mxu0 0
  %89 = vmatpush1.bf16.msra.mxu0 0
  %90 = vmatprep.mubr.bf16.mxu0 0
  %91 = vmatmul.mubr.bf16.gmra.mrb[0].mxu0 %v56
  %v92 = vpop.f32.mrb[0].mxu0
  %v93 = vadd.f32 0.0, %v92
  %v94 = vpop.f32.mrb[0].mxu0
  %v95 = vadd.f32 0.0, %v94
  %v96 = vpop.f32.mrb[0].mxu0
  %v97 = vpop.f32.mrb[0].mxu0
  %98 = vdwg.mxu0
  %99 = vmatprep.subr.bf16.mxu0 0
  %100 = vmatpush1.bf16.msra.mxu0 %v44
  %101 = vmatprep.subr.bf16.mxu0 0
  %102 = vmatpush1.bf16.msra.mxu0 %v47
  %103 = vmatprep.subr.bf16.mxu0 0
  %104 = vmatpush1.bf16.msra.mxu0 0
  %105 = vmatprep.subr.bf16.mxu0 0
  %106 = vmatpush1.bf16.msra.mxu0 0
  %107 = vmatprep.subr.bf16.mxu0 0
  %108 = vmatpush1.bf16.msra.mxu0 0
  %109 = vmatprep.subr.bf16.mxu0 0
  %110 = vmatpush1.bf16.msra.mxu0 0
  %111 = vmatprep.subr.bf16.mxu0 0
  %112 = vmatpush1.bf16.msra.mxu0 0
  %113 = vmatprep.subr.bf16.mxu0 0
  %114 = vmatpush1.bf16.msra.mxu0 0
  %115 = vmatprep.subr.bf16.mxu0 0
  %116 = vmatpush1.bf16.msra.mxu0 0
  %117 = vmatprep.subr.bf16.mxu0 0
  %118 = vmatpush1.bf16.msra.mxu0 0
  %119 = vmatprep.subr.bf16.mxu0 0
  %120 = vmatpush1.bf16.msra.mxu0 0
  %121 = vmatprep.subr.bf16.mxu0 0
  %122 = vmatpush1.bf16.msra.mxu0 0
  %123 = vmatprep.subr.bf16.mxu0 0
  %124 = vmatpush1.bf16.msra.mxu0 0
  %125 = vmatprep.subr.bf16.mxu0 0
  %126 = vmatpush1.bf16.msra.mxu0 0
  %127 = vmatprep.subr.bf16.mxu0 0
  %128 = vmatpush1.bf16.msra.mxu0 0
  %129 = vmatprep.subr.bf16.mxu0 0
  %130 = vmatpush1.bf16.msra.mxu0 0
  %131 = vmatprep.mubr.bf16.mxu0 0
  %132 = vmatmul.mubr.bf16.gmra.mrb[0].mxu0 %v56
  %v133 = vpop.f32.mrb[0].mxu0
  %v134 = vadd.f32 0.0, %v133
  %v135 = vpop.f32.mrb[0].mxu0
  %v136 = vpop.f32.mrb[0].mxu0
  %v137 = vpop.f32.mrb[0].mxu0
  %138 = vdwg.mxu0
  %v139 = vpack.c.bf16 %v93, %v93
  %v140 = vpack.c.bf16 %v95, %v95
  %141 = vmatprep.subr.bf16.mxu0 0
  %142 = vmatpush1.bf16.xpose.msra.mxu0 %v140
  %143 = vmatprep.subr.bf16.mxu0 0
  %144 = vmatpush1.bf16.xpose.msra.mxu0 0
  %145 = vmatprep.subr.bf16.mxu0 0
  %146 = vmatpush1.bf16.xpose.msra.mxu0 0
  %147 = vmatprep.subr.bf16.mxu0 0
  %148 = vmatpush1.bf16.xpose.msra.mxu0 0
  %149 = vmatprep.subr.bf16.mxu0 0
  %150 = vmatpush1.bf16.xpose.msra.mxu0 0
  %151 = vmatprep.subr.bf16.mxu0 0
  %152 = vmatpush1.bf16.xpose.msra.mxu0 0
  %153 = vmatprep.subr.bf16.mxu0 0
  %154 = vmatpush1.bf16.xpose.msra.mxu0 0
  %155 = vmatprep.subr.bf16.mxu0 0
  %156 = vmatpush1.bf16.xpose.msra.mxu0 0
  %157 = vmatprep.subr.bf16.mxu0 0
  %158 = vmatpush1.bf16.xpose.msra.mxu0 0
  %159 = vmatprep.subr.bf16.mxu0 0
  %160 = vmatpush1.bf16.xpose.msra.mxu0 0
  %161 = vmatprep.subr.bf16.mxu0 0
  %162 = vmatpush1.bf16.xpose.msra.mxu0 0
  %163 = vmatprep.subr.bf16.mxu0 0
  %164 = vmatpush1.bf16.xpose.msra.mxu0 0
  %165 = vmatprep.subr.bf16.mxu0 0
  %166 = vmatpush1.bf16.xpose.msra.mxu0 0
  %167 = vmatprep.subr.bf16.mxu0 0
  %168 = vmatpush1.bf16.xpose.msra.mxu0 0
  %169 = vmatprep.subr.bf16.mxu0 0
  %170 = vmatpush1.bf16.xpose.msra.mxu0 0
  %171 = vmatprep.subr.bf16.mxu0 0
  %172 = vmatpush1.bf16.xpose.msra.mxu0 0
  %173 = vmatprep.mubr.bf16.mxu0 0
  %174 = vmatmul.mubr.bf16.gmra.mrb[0].mxu0 %v139
  %v175 = vpop.f32.mrb[0].mxu0
  %v176 = vadd.f32 0.0, %v175
  %v177 = vpop.f32.mrb[0].mxu0
  %v178 = vpop.f32.mrb[0].mxu0
  %v179 = vpop.f32.mrb[0].mxu0
  %180 = vdwg.mxu0
  %vm181 = vcmask 64512
  %v182 = vsel %vm181, %v176, -inf
  %183 = vmax.xlane.f32.xlu0 %v182
  %v184 = vpop.xlane.xlu0 %183
  %v185 = vsub.f32 %v176, %v184
  %v186 = vmul.f32 %v185, 1.442695
  %v187 = vpow.pop %v186
  %v188 = vsel %vm181, %v187, 0.0
  %189 = vadd.xlane.f32.xlu0 %v188
  %v190 = vpop.xlane.xlu0 %189
  %v191 = vrcp.pop %v190
  %v192 = vmul.f32 %v187, %v191
  %v193 = vpack.c.bf16 %v192, %v192
  %v194 = vpack.c.bf16 %v134, %v134
  %v196 = vsel %vm181, %v193, 0
  %vm198 = vcmask 1043456
  %v200 = vsel %vm198, %v194, 0
  %202 = vmatprep.subr.bf16.mxu0 0
  %203 = vmatpush1.bf16.msra.mxu0 %v200
  %204 = vmatprep.subr.bf16.mxu0 0
  %205 = vmatpush1.bf16.msra.mxu0 0
  %206 = vmatprep.subr.bf16.mxu0 0
  %207 = vmatpush1.bf16.msra.mxu0 0
  %208 = vmatprep.subr.bf16.mxu0 0
  %209 = vmatpush1.bf16.msra.mxu0 0
  %210 = vmatprep.subr.bf16.mxu0 0
  %211 = vmatpush1.bf16.msra.mxu0 0
  %212 = vmatprep.subr.bf16.mxu0 0
  %213 = vmatpush1.bf16.msra.mxu0 0
  %214 = vmatprep.subr.bf16.mxu0 0
  %215 = vmatpush1.bf16.msra.mxu0 0
  %216 = vmatprep.subr.bf16.mxu0 0
  %217 = vmatpush1.bf16.msra.mxu0 0
  %218 = vmatprep.subr.bf16.mxu0 0
  %219 = vmatpush1.bf16.msra.mxu0 0
  %220 = vmatprep.subr.bf16.mxu0 0
  %221 = vmatpush1.bf16.msra.mxu0 0
  %222 = vmatprep.subr.bf16.mxu0 0
  %223 = vmatpush1.bf16.msra.mxu0 0
  %224 = vmatprep.subr.bf16.mxu0 0
  %225 = vmatpush1.bf16.msra.mxu0 0
  %226 = vmatprep.subr.bf16.mxu0 0
  %227 = vmatpush1.bf16.msra.mxu0 0
  %228 = vmatprep.subr.bf16.mxu0 0
  %229 = vmatpush1.bf16.msra.mxu0 0
  %230 = vmatprep.subr.bf16.mxu0 0
  %231 = vmatpush1.bf16.msra.mxu0 0
  %232 = vmatprep.subr.bf16.mxu0 0
  %233 = vmatpush1.bf16.msra.mxu0 0
  %234 = vmatprep.mubr.bf16.mxu0 0
  %235 = vmatmul.mubr.bf16.gmra.mrb[0].mxu0 %v196
  %v236 = vpop.f32.mrb[0].mxu0
  %v237 = vadd.f32 0.0, %v236
  %v238 = vpop.f32.mrb[0].mxu0
  %v239 = vpop.f32.mrb[0].mxu0
  %v240 = vpop.f32.mrb[0].mxu0
  %241 = vdwg.mxu0
  %242 = vst [vmem:[%s2] sm:$0xff] %v237
  // Predicated region
  $region10: #{apply.1} parent=0 // pred_check
    _
  $region11: #{apply.1} parent=0 // pred_check_branch
    %244 = sbr.rel (0) target = $region13
  $region12: #{apply.1} parent=0 // pred_region
    _
  $region13: #{apply.1} parent=0 // pred_fallthru
    _
  // Predicated region
  $region14: #{apply.1} parent=0 // pred_check
    _
  $region15: #{apply.1} parent=0 // pred_check_branch
    %246 = sbr.rel (0) target = $region17
  $region16: #{apply.1} parent=0 // pred_region
    _
  $region17: #{apply.1} parent=0 // pred_fallthru
    _

</llo_original>
